<compile_context>
chip_gen: v7x
topology: tpu7x:2x2x1
jax: 0.10.0
libtpu: 0.0.40
codegen_flags: <defaults>
</compile_context>

<pallas_src>
import functools

import jax
import jax.numpy as jnp
from jax.experimental import pallas as pl
from jax.experimental.pallas import tpu as pltpu


def _round_up(x: int, m: int) -> int:
    return ((x + m - 1) // m) * m


def _tpu_generation_defaults():
    """Per-generation tile / VMEM defaults (host-side, evaluated once)."""
    vmem_cap = None
    try:
        vmem_cap = int(pltpu.get_tpu_info().vmem_capacity_bytes)
    except Exception:
        vmem_cap = None
    kind = ""
    try:
        kind = jax.devices()[0].device_kind.lower()
    except Exception:
        kind = ""
    is_v7 = "v7" in kind
    is_v5e = ("v5e" in kind) or ("v5 lite" in kind) or ("v5litepod" in kind)
    if vmem_cap is None:
        vmem_cap = (64 << 20) if is_v7 else (128 << 20)
    # v5e: 4x128x128 MXU, no bf16 VPU, 1 vstore slot -> 128-row tiles.
    # v6e / v7x: 256-wide MXU -> 256-row tiles.
    tm_max = 128 if is_v5e else 256
    return tm_max, vmem_cap, is_v7


_TM_MAX, _VMEM_CAP_BYTES, _IS_V7X = _tpu_generation_defaults()


def _make_mlp_kernel(num_layers: int):
    """Kernel refs: (x, w_0..w_{L-1}, b_0..b_{L-1}, out)."""

    def kernel(*refs):
        x_ref = refs[0]
        w_refs = refs[1:1 + num_layers]
        b_refs = refs[1 + num_layers:1 + 2 * num_layers]
        o_ref = refs[-1]

        h = x_ref[...]                                    # bf16 tile (tm, D0p)
        for l in range(num_layers):
            # MXU matmul in bf16 with f32 accumulation.
            acc = jnp.dot(h, w_refs[l][...],
                          preferred_element_type=jnp.float32)
            acc = acc + b_refs[l][...]                    # f32 bias (1, Np) bcast
            h_f32 = jnp.maximum(acc, 0.0)                 # ReLU epilogue in f32
            if l < num_layers - 1:
                h = h_f32.astype(jnp.bfloat16)            # next layer's LHS
            else:
                o_ref[...] = h_f32.astype(o_ref.dtype)

    return kernel


def prepare_mlp_params(params):
    """One-time packing, kept OFF the per-call hot path.

    Pads every feature dim to a multiple of 128 (lane-dense loads, unmasked
    stores), casts weights to bf16 (MXU dtype) and biases to f32 (1, Np).
    Zero padding is correctness-neutral: relu(0 @ W + 0) = 0.
    Returns (ws, bs, dims) where dims are the real (unpadded) layer widths.
    """
    dims = tuple([int(params[0][0].shape[0])] +
                 [int(w.shape[1]) for w, _ in params])
    dims_p = tuple(_round_up(d, 128) for d in dims)
    ws, bs = [], []
    for l, (w, b) in enumerate(params):
        k, n = w.shape
        kp, np_ = dims_p[l], dims_p[l + 1]
        wp = jnp.zeros((kp, np_), jnp.bfloat16).at[:k, :n].set(
            w.astype(jnp.bfloat16))
        bp = jnp.zeros((1, np_), jnp.float32).at[:, :n].set(
            b.reshape(1, -1).astype(jnp.float32))
        ws.append(wp)
        bs.append(bp)
    return tuple(ws), tuple(bs), dims


@functools.partial(jax.jit, static_argnames=("dims", "out_dtype"))
def mlp_forward(x, ws, bs, *, dims, out_dtype=jnp.float32):
    """Fused forward: relu(... relu(relu(x @ W0 + b0) @ W1 + b1) ...).

    x:        (M, dims[0]) float32 activations.
    ws, bs:   pre-padded params from prepare_mlp_params().
    dims:     real (unpadded) layer widths, static.
    out_dtype: jnp.float32 (default, exact epilogue parity) or jnp.bfloat16 to
               halve output writeback bandwidth in memory-bound regimes.
    """
    M, D0 = x.shape
    num_layers = len(ws)
    assert dims[0] == D0
    dims_p = tuple(int(w.shape[0]) for w in ws) + (int(ws[-1].shape[1]),)
    out_itemsize = jnp.dtype(out_dtype).itemsize

    # ---- Row tiling: multiples of 16 (bf16 sublane tile). Split into >= 2
    # grid programs whenever possible so both v7x TensorCores get work.
    Mp = _round_up(max(M, 1), 16)
    if Mp >= 32:
        tm = min(_TM_MAX, _round_up(Mp // 2, 16))
    else:
        tm = Mp
    Mp = _round_up(Mp, tm)
    grid = (Mp // tm,)

    # ---- Per-call activation padding (the only padding left on the hot path).
    if (M, D0) == (Mp, dims_p[0]) and x.dtype == jnp.bfloat16:
        xp = x
    else:
        xp = jnp.zeros((Mp, dims_p[0]), jnp.bfloat16).at[:M, :D0].set(
            x.astype(jnp.bfloat16))

    # ---- BlockSpecs. Weights/biases are fully VMEM-resident (constant index
    # maps); on v7x (64 MiB VMEM) they are single-buffered.
    single_buffer = _IS_V7X and hasattr(pl, "Buffered")

    def _resident_spec(shape):
        if single_buffer:
            try:
                return pl.BlockSpec(shape, lambda i: (0, 0),
                                    pipeline_mode=pl.Buffered(1))
            except TypeError:
                pass
        return pl.BlockSpec(shape, lambda i: (0, 0))

    in_specs = [pl.BlockSpec((tm, dims_p[0]), lambda i: (i, 0))]
    for l in range(num_layers):
        in_specs.append(_resident_spec((dims_p[l], dims_p[l + 1])))
    for l in range(num_layers):
        in_specs.append(_resident_spec((1, dims_p[l + 1])))
    out_spec = pl.BlockSpec((tm, dims_p[-1]), lambda i: (i, 0))

    # ---- Explicit VMEM budget: resident params (x1 or x2 buffers) +
    # double-buffered I/O tiles + in-flight activation working set, +25%.
    resident_bytes = (sum(int(w.size) * 2 for w in ws)
                      + sum(int(b.size) * 4 for b in bs))
    resident_bufs = 1 if single_buffer else 2
    io_bytes = 2 * (tm * dims_p[0] * 2) + 2 * (tm * dims_p[-1] * out_itemsize)
    work_bytes = 2 * tm * max(dims_p) * 4            # live f32 acc + bf16 copy
    vmem_needed = resident_bufs * resident_bytes + io_bytes + work_bytes
    if vmem_needed > int(_VMEM_CAP_BYTES * 0.8):
        # TODO(synk): switch to the K/N-tiled streaming-weight kernel here.
        raise NotImplementedError(
            "resident weights exceed VMEM budget; K/N tiling not implemented")
    vmem_limit = int(min(max(int(vmem_needed * 1.25), 32 << 20),
                         int(_VMEM_CAP_BYTES * 0.9)))

    # ---- Cost estimate from real (unpadded) shapes.
    flops = sum(2 * M * dims[l] * dims[l + 1] for l in range(num_layers))
    bytes_accessed = (M * D0 * 2
                      + sum(dims[l] * dims[l + 1] * 2 for l in range(num_layers))
                      + sum(dims[l + 1] * 4 for l in range(num_layers))
                      + M * dims[-1] * out_itemsize)

    out_p = pl.pallas_call(
        _make_mlp_kernel(num_layers),
        out_shape=jax.ShapeDtypeStruct((Mp, dims_p[-1]), out_dtype),
        grid_spec=pltpu.PrefetchScalarGridSpec(
            num_scalar_prefetch=0,
            grid=grid,
            in_specs=in_specs,
            out_specs=out_spec,
        ),
        compiler_params=pltpu.CompilerParams(
            dimension_semantics=("parallel",),
            vmem_limit_bytes=vmem_limit,
        ),
        cost_estimate=pl.CostEstimate(
            flops=flops, transcendentals=0, bytes_accessed=bytes_accessed),
    )(xp, *ws, *bs)

    return out_p[:M, :dims[-1]].astype(jnp.float32)


def init_mlp_params(shape, key):
    """Mirror torch.nn.Linear default init (uniform +-1/sqrt(fan_in)).

    Returns list of (W[in, out], b[out]) per layer (W stored transposed
    relative to torch so the kernel does a plain x @ W).
    """
    params = []
    for d in range(len(shape) - 1):
        fan_in, fan_out = shape[d], shape[d + 1]
        key, kw, kb = jax.random.split(key, 3)
        bound = 1.0 / jnp.sqrt(jnp.float32(fan_in))
        w = jax.random.uniform(kw, (fan_in, fan_out), jnp.float32, -bound, bound)
        b = jax.random.uniform(kb, (fan_out,), jnp.float32, -bound, bound)
        params.append((w, b))
    return params


def reference_forward(x, params):
    """Pure-JAX reference with the same bf16-matmul / f32-epilogue semantics."""
    h = x
    for w, b in params:
        acc = jnp.dot(h.astype(jnp.bfloat16), w.astype(jnp.bfloat16),
                      preferred_element_type=jnp.float32)
        h = jnp.maximum(acc + b.reshape(1, -1), 0.0)
    return h


def reference_forward_f32(x, params):
    """Full-f32 reference (matches torch.nn.Linear numerics)."""
    h = x
    for w, b in params:
        h = jnp.maximum(jnp.dot(h, w) + b.reshape(1, -1), 0.0)
    return h


if __name__ == "__main__":
    key = jax.random.PRNGKey(0)

    # shape=[32, 64, 16] -> Linear(32,64)+ReLU, Linear(64,16)+ReLU
    layer_shape = [32, 64, 16]
    batch = 8

    kx, kp = jax.random.split(key)
    x = jax.random.normal(kx, (batch, layer_shape[0]), jnp.float32)
    params = init_mlp_params(layer_shape, kp)

    # One-time parameter packing (padding/cast hoisted off the per-call path).
    ws, bs, dims = prepare_mlp_params(params)

    out = mlp_forward(x, ws, bs, dims=dims)
    out = jax.block_until_ready(out)

    assert out.shape == (batch, layer_shape[-1])
    # Exact-semantics reference (bf16 matmul, f32 epilogue).
    ref = reference_forward(x, params)
    assert jnp.allclose(out, ref, atol=1e-3, rtol=1e-3), "mismatch vs bf16 reference"
    # Full-f32 reference (torch parity), looser tolerance for bf16 rounding.
    ref32 = reference_forward_f32(x, params)
    assert jnp.allclose(out, ref32, atol=5e-2, rtol=5e-2), "mismatch vs f32 reference"

    print("KERNEL_OK")
</pallas_src>

<mosaic_0001>
module attributes {stable_mosaic.version = 11 : i64} {
  func.func @kernel(%arg0: i32, %arg1: memref<16x128xbf16, #tpu.memory_space<vmem>>, %arg2: memref<128x128xbf16, #tpu.memory_space<vmem>>, %arg3: memref<128x128xbf16, #tpu.memory_space<vmem>>, %arg4: memref<1x128xf32, #tpu.memory_space<vmem>>, %arg5: memref<1x128xf32, #tpu.memory_space<vmem>>, %arg6: memref<16x128xf32, #tpu.memory_space<vmem>>) attributes {dimension_semantics = [#tpu.dimension_semantics<parallel>], iteration_bounds = array<i64: 1>, scalar_prefetch = 0 : i64, scratch_operands = 0 : i64, tpu.core_type = #tpu.core_type<tc>, window_params = [{transform_indices = @transform_0, window_bounds = array<i64: 16, 128>}, {pipeline_mode = #tpu.pipeline_mode<synchronous>, transform_indices = @transform_1, window_bounds = array<i64: 128, 128>}, {pipeline_mode = #tpu.pipeline_mode<synchronous>, transform_indices = @transform_2, window_bounds = array<i64: 128, 128>}, {pipeline_mode = #tpu.pipeline_mode<synchronous>, transform_indices = @transform_3, window_bounds = array<i64: 1, 128>}, {pipeline_mode = #tpu.pipeline_mode<synchronous>, transform_indices = @transform_4, window_bounds = array<i64: 1, 128>}, {transform_indices = @transform_5, window_bounds = array<i64: 16, 128>}]} {
    %c0 = arith.constant 0 : index
    %c0_0 = arith.constant 0 : index
    %0 = vector.load %arg1[%c0, %c0_0] : memref<16x128xbf16, #tpu.memory_space<vmem>>, vector<16x128xbf16>
    %c0_1 = arith.constant 0 : index
    %c0_2 = arith.constant 0 : index
    %1 = vector.load %arg2[%c0_1, %c0_2] : memref<128x128xbf16, #tpu.memory_space<vmem>>, vector<128x128xbf16>
    %cst = arith.constant dense<0.000000e+00> : vector<16x128xf32>
    %2 = tpu.matmul %0, %1, %cst {dimension_numbers = #tpu.dot_dimension_numbers<[1], [0], [0], [1], [0, 0, 1, 1], [], []>} : vector<16x128xbf16>, vector<128x128xbf16>, vector<16x128xf32> -> vector<16x128xf32>
    %c0_3 = arith.constant 0 : index
    %c0_4 = arith.constant 0 : index
    %3 = vector.load %arg4[%c0_3, %c0_4] : memref<1x128xf32, #tpu.memory_space<vmem>>, vector<1x128xf32>
    %4 = vector.broadcast %3 : vector<1x128xf32> to vector<16x128xf32>
    %5 = arith.addf %2, %4 : vector<16x128xf32>
    %cst_5 = arith.constant 0.000000e+00 : f32
    %6 = vector.broadcast %cst_5 : f32 to vector<16x128xf32>
    %7 = arith.maximumf %5, %6 : vector<16x128xf32>
    %8 = arith.truncf %7 : vector<16x128xf32> to vector<16x128xbf16>
    %c0_6 = arith.constant 0 : index
    %c0_7 = arith.constant 0 : index
    %9 = vector.load %arg3[%c0_6, %c0_7] : memref<128x128xbf16, #tpu.memory_space<vmem>>, vector<128x128xbf16>
    %cst_8 = arith.constant dense<0.000000e+00> : vector<16x128xf32>
    %10 = tpu.matmul %8, %9, %cst_8 {dimension_numbers = #tpu.dot_dimension_numbers<[1], [0], [0], [1], [0, 0, 1, 1], [], []>} : vector<16x128xbf16>, vector<128x128xbf16>, vector<16x128xf32> -> vector<16x128xf32>
    %c0_9 = arith.constant 0 : index
    %c0_10 = arith.constant 0 : index
    %11 = vector.load %arg5[%c0_9, %c0_10] : memref<1x128xf32, #tpu.memory_space<vmem>>, vector<1x128xf32>
    %12 = vector.broadcast %11 : vector<1x128xf32> to vector<16x128xf32>
    %13 = arith.addf %10, %12 : vector<16x128xf32>
    %cst_11 = arith.constant 0.000000e+00 : f32
    %14 = vector.broadcast %cst_11 : f32 to vector<16x128xf32>
    %15 = arith.maximumf %13, %14 : vector<16x128xf32>
    %c0_12 = arith.constant 0 : index
    %c0_13 = arith.constant 0 : index
    %16 = vector.load %arg6[%c0_12, %c0_13] : memref<16x128xf32, #tpu.memory_space<vmem>>, vector<16x128xf32>
    tpu.vector_store %arg6[%c0_12, %c0_13], %15 {strides = array<i32>} : memref<16x128xf32, #tpu.memory_space<vmem>>, vector<16x128xf32>,
    return
  }
  func.func @transform_0(%arg0: i32) -> (i32, i32) {
    %c0_i32 = arith.constant 0 : i32
    %c0_i32_0 = arith.constant 0 : i32
    return %arg0, %c0_i32 : i32, i32
  }
  func.func @transform_1(%arg0: i32) -> (i32, i32) {
    %c0_i32 = arith.constant 0 : i32
    %c0_i32_0 = arith.constant 0 : i32
    %c0_i32_1 = arith.constant 0 : i32
    return %c0_i32, %c0_i32_0 : i32, i32
  }
  func.func @transform_2(%arg0: i32) -> (i32, i32) {
    %c0_i32 = arith.constant 0 : i32
    %c0_i32_0 = arith.constant 0 : i32
    %c0_i32_1 = arith.constant 0 : i32
    return %c0_i32, %c0_i32_0 : i32, i32
  }
  func.func @transform_3(%arg0: i32) -> (i32, i32) {
    %c0_i32 = arith.constant 0 : i32
    %c0_i32_0 = arith.constant 0 : i32
    %c0_i32_1 = arith.constant 0 : i32
    return %c0_i32, %c0_i32_0 : i32, i32
  }
  func.func @transform_4(%arg0: i32) -> (i32, i32) {
    %c0_i32 = arith.constant 0 : i32
    %c0_i32_0 = arith.constant 0 : i32
    %c0_i32_1 = arith.constant 0 : i32
    return %c0_i32, %c0_i32_0 : i32, i32
  }
  func.func @transform_5(%arg0: i32) -> (i32, i32) {
    %c0_i32 = arith.constant 0 : i32
    %c0_i32_0 = arith.constant 0 : i32
    return %arg0, %c0_i32 : i32, i32
  }
}

</mosaic_0001>

<llo_original>
// kernel: mlp_forward.1
$region0: #{mlp_forward.1}
  #allocation0 [shape = 'u32[]', space=smem, size = 0x4, offset = 0x4, fixed_abs, tag = 'smem constant byte address 0x4 - core index']
  #allocation1 [shape = 'u32[144,128]{1,0:T(1,128)}', space=vmem, size = 0x12000, scoped, tag = 'internal scratch']
  %s0 = inlined_call_operand.vmem [shape: bf16[16,128], index: 0, kind: input, shape index: {}]
  %s1 = inlined_call_operand.hbm [shape: bf16[128,128], index: 1, kind: input, shape index: {}]
  %s2 = inlined_call_operand.hbm [shape: bf16[128,128], index: 2, kind: input, shape index: {}]
  %s3 = inlined_call_operand.vmem [shape: f32[1,128], index: 3, kind: input, shape index: {}]
  %s4 = inlined_call_operand.vmem [shape: f32[1,128], index: 4, kind: input, shape index: {}]
  %s5 = inlined_call_operand.vmem [shape: f32[16,128], index: 5, kind: output, shape index: {}]
  %s6 = sld [smem:[#allocation0]]
  $region38: #{mlp_forward.1} parent=0
    _
  %s8 = ssub.s32 1, %s6
  %s9 = scalar_select 0, %s8, %s6
  $region1: #{mlp_forward.1} parent=0
    #allocation2 [shape = 'u8[32768]{0}', space=vmem, size = 0x8000, scoped, tag = 'input window, operand 1, single buffered']
    #allocation3 [shape = 's32[1]{0}', space=sflag, size = 0x4, scoped, tag = 'scoped memory for mlp_forward.1']
    #allocation4 [shape = 'u8[32768]{0}', space=vmem, size = 0x8000, scoped, tag = 'input window, operand 2, single buffered']
    #allocation5 [shape = 's32[1]{0}', space=sflag, size = 0x4, scoped, tag = 'scoped memory for mlp_forward.1']
    %10 = vsyncpa [#allocation3], 0
    %11 = vsyncpa [#allocation5], 0
    // Predicated region
    $region2: #{mlp_forward.1} parent=1 // pred_check
      _
    $region3: #{mlp_forward.1} parent=1 // pred_check_branch
      %13 = sbr.rel (0) target = $region5
    $region4: #{mlp_forward.1} parent=1 // pred_region
      _
    $region5: #{mlp_forward.1} parent=1 // pred_fallthru
      _
    // Predicated region
    $region6: #{mlp_forward.1} parent=1 // pred_check
      _
    $region7: #{mlp_forward.1} parent=1 // pred_check_branch
      %15 = sbr.rel (0) target = $region9
    $region8: #{mlp_forward.1} parent=1 // pred_region
      %s17 = ssub.s32 1024, 1024
      %18 = vsyncadd [#allocation3], %s17
      %s19 = sshll.u32 [#allocation2], 4
      %s20 = int_to_ptr.vmem [resolvable:$true] %s19
      %25 = dma.hbm_to_vmem [thread:$0]  %s1, 1024, %s20, [#allocation3], 64, 64, 4
    $region9: #{mlp_forward.1} parent=1 // pred_fallthru
      _
    // Predicated region
    $region10: #{mlp_forward.1} parent=1 // pred_check
      _
    $region11: #{mlp_forward.1} parent=1 // pred_check_branch
      %27 = sbr.rel (0) target = $region13
    $region12: #{mlp_forward.1} parent=1 // pred_region
      %s29 = ssub.s32 1024, 1024
      %30 = vsyncadd [#allocation5], %s29
      %s31 = sshll.u32 [#allocation4], 4
      %s32 = int_to_ptr.vmem [resolvable:$true] %s31
      %37 = dma.hbm_to_vmem [thread:$0]  %s2, 1024, %s32, [#allocation5], 64, 64, 4
    $region13: #{mlp_forward.1} parent=1 // pred_fallthru
      _
    // Predicated region
    $region14: #{mlp_forward.1} parent=1 // pred_check
      _
    $region15: #{mlp_forward.1} parent=1 // pred_check_branch
      %39 = sbr.rel (0) target = $region17
    $region16: #{mlp_forward.1} parent=1 // pred_region
      _
    $region17: #{mlp_forward.1} parent=1 // pred_fallthru
      _
    // Predicated region
    $region18: #{mlp_forward.1} parent=1 // pred_check
      _
    $region19: #{mlp_forward.1} parent=1 // pred_check_branch
      %41 = sbr.rel (0) target = $region21
    $region20: #{mlp_forward.1} parent=1 // pred_region
      _
    $region21: #{mlp_forward.1} parent=1 // pred_fallthru
      _
    // Predicated region
    $region22: #{mlp_forward.1} parent=1 // pred_check
      _
    $region23: #{mlp_forward.1} parent=1 // pred_check_branch
      %43 = sbr.rel (0) target = $region25
    $region24: #{mlp_forward.1} parent=1 // pred_region
      %44 = dma.done [#allocation3], 1024
    $region25: #{mlp_forward.1} parent=1 // pred_fallthru
      _
    // Predicated region
    $region26: #{mlp_forward.1} parent=1 // pred_check
      _
    $region27: #{mlp_forward.1} parent=1 // pred_check_branch
      %46 = sbr.rel (0) target = $region29
    $region28: #{mlp_forward.1} parent=1 // pred_region
      %47 = dma.done [#allocation5], 1024
    $region29: #{mlp_forward.1} parent=1 // pred_fallthru
      _
    %v49 = vld [vmem:[%s0] sm:$0xf]
    %v50 = vld [vmem:[%s0 + $0x4] sm:$0xf]
    %v51 = vld [vmem:[#allocation2] sm:$0xf]
    %v52 = vld [vmem:[#allocation2 + $0x4] sm:$0xf]
    %v53 = vld [vmem:[#allocation2 + $0x8] sm:$0xf]
    %v54 = vld [vmem:[#allocation2 + $0xc] sm:$0xf]
    %v55 = vld [vmem:[#allocation2 + $0x10] sm:$0xf]
    %v56 = vld [vmem:[#allocation2 + $0x14] sm:$0xf]
    %v57 = vld [vmem:[#allocation2 + $0x18] sm:$0xf]
    %v58 = vld [vmem:[#allocation2 + $0x1c] sm:$0xf]
    %v59 = vld [vmem:[#allocation2 + $0x20] sm:$0xf]
    %v60 = vld [vmem:[#allocation2 + $0x24] sm:$0xf]
    %v61 = vld [vmem:[#allocation2 + $0x28] sm:$0xf]
    %v62 = vld [vmem:[#allocation2 + $0x2c] sm:$0xf]
    %v63 = vld [vmem:[#allocation2 + $0x30] sm:$0xf]
    %v64 = vld [vmem:[#allocation2 + $0x34] sm:$0xf]
    %v65 = vld [vmem:[#allocation2 + $0x38] sm:$0xf]
    %v66 = vld [vmem:[#allocation2 + $0x3c] sm:$0xf]
    %v67 = vld [vmem:[%s3] sm:$0x1]
    %v69 = vlaneseq
    %v70 = vshrl.u32 %v69, 7
    %v71 = vsub.s32 0, %v70
    %v72 = vrot.slane %v67, %v71
    %v76 = vunpack.c.l.b16 %v49
    %v77 = vunpack.c.l.b16 %v50
    %v78 = vpack.c.b16 %v77, %v76
    %v96 = vunpack.c.l.b16 %v51
    %v97 = vunpack.c.l.b16 %v52
    %v98 = vunpack.c.l.b16 %v53
    %v99 = vunpack.c.l.b16 %v54
    %v100 = vunpack.c.l.b16 %v55
    %v101 = vunpack.c.l.b16 %v56
    %v102 = vunpack.c.l.b16 %v57
    %v103 = vunpack.c.l.b16 %v58
    %v104 = vunpack.c.l.b16 %v59
    %v105 = vunpack.c.l.b16 %v60
    %v106 = vunpack.c.l.b16 %v61
    %v107 = vunpack.c.l.b16 %v62
    %v108 = vunpack.c.l.b16 %v63
    %v109 = vunpack.c.l.b16 %v64
    %v110 = vunpack.c.l.b16 %v65
    %v111 = vunpack.c.l.b16 %v66
    %v112 = vpack.c.b16 %v97, %v96
    %v113 = vpack.c.b16 %v99, %v98
    %v114 = vpack.c.b16 %v101, %v100
    %v115 = vpack.c.b16 %v103, %v102
    %v116 = vpack.c.b16 %v105, %v104
    %v117 = vpack.c.b16 %v107, %v106
    %v118 = vpack.c.b16 %v109, %v108
    %v119 = vpack.c.b16 %v111, %v110
    %128 = vmatprep.subr.bf16.mxu0 0
    %129 = vmatpush1.bf16.msra.mxu0 %v112
    %130 = vmatprep.subr.bf16.mxu0 0
    %131 = vmatpush1.bf16.msra.mxu0 %v113
    %132 = vmatprep.subr.bf16.mxu0 0
    %133 = vmatpush1.bf16.msra.mxu0 %v114
    %134 = vmatprep.subr.bf16.mxu0 0
    %135 = vmatpush1.bf16.msra.mxu0 %v115
    %136 = vmatprep.subr.bf16.mxu0 0
    %137 = vmatpush1.bf16.msra.mxu0 %v116
    %138 = vmatprep.subr.bf16.mxu0 0
    %139 = vmatpush1.bf16.msra.mxu0 %v117
    %140 = vmatprep.subr.bf16.mxu0 0
    %141 = vmatpush1.bf16.msra.mxu0 %v118
    %142 = vmatprep.subr.bf16.mxu0 0
    %143 = vmatpush1.bf16.msra.mxu0 %v119
    %144 = vmatprep.subr.bf16.mxu0 0
    %145 = vmatpush1.bf16.msra.mxu0 0
    %146 = vmatprep.subr.bf16.mxu0 0
    %147 = vmatpush1.bf16.msra.mxu0 0
    %148 = vmatprep.subr.bf16.mxu0 0
    %149 = vmatpush1.bf16.msra.mxu0 0
    %150 = vmatprep.subr.bf16.mxu0 0
    %151 = vmatpush1.bf16.msra.mxu0 0
    %152 = vmatprep.subr.bf16.mxu0 0
    %153 = vmatpush1.bf16.msra.mxu0 0
    %154 = vmatprep.subr.bf16.mxu0 0
    %155 = vmatpush1.bf16.msra.mxu0 0
    %156 = vmatprep.subr.bf16.mxu0 0
    %157 = vmatpush1.bf16.msra.mxu0 0
    %158 = vmatprep.subr.bf16.mxu0 0
    %159 = vmatpush1.bf16.msra.mxu0 0
    %160 = vmatprep.mubr.bf16.mxu0 0
    %161 = vmatmul.mubr.bf16.gmra.mrb[0].mxu0 %v78
    %v162 = vpop.f32.mrb[0].mxu0
    %v163 = vadd.f32 %v72, %v162
    %v164 = vpop.f32.mrb[0].mxu0
    %v165 = vpop.f32.mrb[0].mxu0
    %v166 = vadd.f32 %v72, %v165
    %v167 = vpop.f32.mrb[0].mxu0
    %168 = vdwg.mxu0
    %v169 = vmax.f32 %v163, 0.0
    %v170 = vmax.f32 %v166, 0.0
    %v171 = vpack.c.bf16 %v170, %v169
    %v172 = vld [vmem:[#allocation4] sm:$0xf]
    %v173 = vld [vmem:[#allocation4 + $0x4] sm:$0xf]
    %v174 = vld [vmem:[#allocation4 + $0x8] sm:$0xf]
    %v175 = vld [vmem:[#allocation4 + $0xc] sm:$0xf]
    %v176 = vld [vmem:[#allocation4 + $0x10] sm:$0xf]
    %v177 = vld [vmem:[#allocation4 + $0x14] sm:$0xf]
    %v178 = vld [vmem:[#allocation4 + $0x18] sm:$0xf]
    %v179 = vld [vmem:[#allocation4 + $0x1c] sm:$0xf]
    %v180 = vld [vmem:[#allocation4 + $0x20] sm:$0xf]
    %v181 = vld [vmem:[#allocation4 + $0x24] sm:$0xf]
    %v182 = vld [vmem:[#allocation4 + $0x28] sm:$0xf]
    %v183 = vld [vmem:[#allocation4 + $0x2c] sm:$0xf]
    %v184 = vld [vmem:[#allocation4 + $0x30] sm:$0xf]
    %v185 = vld [vmem:[#allocation4 + $0x34] sm:$0xf]
    %v186 = vld [vmem:[#allocation4 + $0x38] sm:$0xf]
    %v187 = vld [vmem:[#allocation4 + $0x3c] sm:$0xf]
    %v188 = vld [vmem:[%s4] sm:$0x1]
    %v190 = vlaneseq
    %v191 = vshrl.u32 %v190, 7
    %v192 = vsub.s32 0, %v191
    %v193 = vrot.slane %v188, %v192
    %v211 = vunpack.c.l.b16 %v172
    %v212 = vunpack.c.l.b16 %v173
    %v213 = vunpack.c.l.b16 %v174
    %v214 = vunpack.c.l.b16 %v175
    %v215 = vunpack.c.l.b16 %v176
    %v216 = vunpack.c.l.b16 %v177
    %v217 = vunpack.c.l.b16 %v178
    %v218 = vunpack.c.l.b16 %v179
    %v219 = vunpack.c.l.b16 %v180
    %v220 = vunpack.c.l.b16 %v181
    %v221 = vunpack.c.l.b16 %v182
    %v222 = vunpack.c.l.b16 %v183
    %v223 = vunpack.c.l.b16 %v184
    %v224 = vunpack.c.l.b16 %v185
    %v225 = vunpack.c.l.b16 %v186
    %v226 = vunpack.c.l.b16 %v187
    %v227 = vpack.c.b16 %v212, %v211
    %v228 = vpack.c.b16 %v214, %v213
    %v229 = vpack.c.b16 %v216, %v215
    %v230 = vpack.c.b16 %v218, %v217
    %v231 = vpack.c.b16 %v220, %v219
    %v232 = vpack.c.b16 %v222, %v221
    %v233 = vpack.c.b16 %v224, %v223
    %v234 = vpack.c.b16 %v226, %v225
    %243 = vmatprep.subr.bf16.mxu0 0
    %244 = vmatpush1.bf16.msra.mxu0 %v227
    %245 = vmatprep.subr.bf16.mxu0 0
    %246 = vmatpush1.bf16.msra.mxu0 %v228
    %247 = vmatprep.subr.bf16.mxu0 0
    %248 = vmatpush1.bf16.msra.mxu0 %v229
    %249 = vmatprep.subr.bf16.mxu0 0
    %250 = vmatpush1.bf16.msra.mxu0 %v230
    %251 = vmatprep.subr.bf16.mxu0 0
    %252 = vmatpush1.bf16.msra.mxu0 %v231
    %253 = vmatprep.subr.bf16.mxu0 0
    %254 = vmatpush1.bf16.msra.mxu0 %v232
    %255 = vmatprep.subr.bf16.mxu0 0
    %256 = vmatpush1.bf16.msra.mxu0 %v233
    %257 = vmatprep.subr.bf16.mxu0 0
    %258 = vmatpush1.bf16.msra.mxu0 %v234
    %259 = vmatprep.subr.bf16.mxu0 0
    %260 = vmatpush1.bf16.msra.mxu0 0
    %261 = vmatprep.subr.bf16.mxu0 0
    %262 = vmatpush1.bf16.msra.mxu0 0
    %263 = vmatprep.subr.bf16.mxu0 0
    %264 = vmatpush1.bf16.msra.mxu0 0
    %265 = vmatprep.subr.bf16.mxu0 0
    %266 = vmatpush1.bf16.msra.mxu0 0
    %267 = vmatprep.subr.bf16.mxu0 0
    %268 = vmatpush1.bf16.msra.mxu0 0
    %269 = vmatprep.subr.bf16.mxu0 0
    %270 = vmatpush1.bf16.msra.mxu0 0
    %271 = vmatprep.subr.bf16.mxu0 0
    %272 = vmatpush1.bf16.msra.mxu0 0
    %273 = vmatprep.subr.bf16.mxu0 0
    %274 = vmatpush1.bf16.msra.mxu0 0
    %275 = vmatprep.mubr.bf16.mxu0 0
    %276 = vmatmul.mubr.bf16.gmra.mrb[0].mxu0 %v171
    %v277 = vpop.f32.mrb[0].mxu0
    %v278 = vadd.f32 %v193, %v277
    %v279 = vpop.f32.mrb[0].mxu0
    %v280 = vpop.f32.mrb[0].mxu0
    %v281 = vadd.f32 %v193, %v280
    %v282 = vpop.f32.mrb[0].mxu0
    %283 = vdwg.mxu0
    %v284 = vmax.f32 %v278, 0.0
    %v285 = vmax.f32 %v281, 0.0
    %286 = vst [vmem:[%s5] sm:$0xff] %v284
    %287 = vst [vmem:[%s5 + $0x8] sm:$0xff] %v285
    // Predicated region
    $region30: #{mlp_forward.1} parent=1 // pred_check
      _
    $region31: #{mlp_forward.1} parent=1 // pred_check_branch
      %289 = sbr.rel (0) target = $region33
    $region32: #{mlp_forward.1} parent=1 // pred_region
      _
    $region33: #{mlp_forward.1} parent=1 // pred_fallthru
      _
    // Predicated region
    $region34: #{mlp_forward.1} parent=1 // pred_check
      _
    $region35: #{mlp_forward.1} parent=1 // pred_check_branch
      %291 = sbr.rel (0) target = $region37
    $region36: #{mlp_forward.1} parent=1 // pred_region
      _
    $region37: #{mlp_forward.1} parent=1 // pred_fallthru
      _
    %292 = vsyncpa [#allocation3], 1
    %293 = vsyncpa [#allocation5], 1

</llo_original>
